<compile_context>
chip_gen: v5e
topology: v5e:2x2
jax: 0.10.0
libtpu: 0.0.40
codegen_flags: <defaults>
</compile_context>

<pallas_src>
import functools

import jax
import jax.numpy as jnp
from jax.experimental import pallas as pl
from jax.experimental.pallas import tpu as pltpu

_VMEM_LIMIT = 32 * 1024 * 1024


def _round_up(x, m):
    return ((x + m - 1) // m) * m


# ---------------------------------------------------------------------------
# Pass 1: tiled im2col matmul (+ per-channel partial BN statistics)
# ---------------------------------------------------------------------------
def _conv_stats_kernel(p_ref, w_ref, y_ref, sum_ref, sq_ref):
    # p_ref: (TM, KCp) bf16 patches   w_ref: (KCp, Cp) bf16 weights (resident)
    # y_ref: (TM, Cp) f32 conv out    sum_ref/sq_ref: (1, Cp) f32 accumulators
    acc = jnp.dot(p_ref[...], w_ref[...], preferred_element_type=jnp.float32)
    y_ref[...] = acc

    @pl.when(pl.program_id(0) == 0)
    def _():
        sum_ref[...] = jnp.zeros_like(sum_ref)
        sq_ref[...] = jnp.zeros_like(sq_ref)

    sum_ref[...] += jnp.sum(acc, axis=0, keepdims=True)
    sq_ref[...] += jnp.sum(acc * acc, axis=0, keepdims=True)


def _conv_only_kernel(p_ref, w_ref, y_ref):
    y_ref[...] = jnp.dot(p_ref[...], w_ref[...],
                         preferred_element_type=jnp.float32)


# ---------------------------------------------------------------------------
# Pass 2: tiled elementwise BN(affine) + ReLU
# ---------------------------------------------------------------------------
def _scale_shift_relu_kernel(y_ref, scale_ref, shift_ref, o_ref):
    y = y_ref[...] * scale_ref[...] + shift_ref[...]
    o_ref[...] = jnp.maximum(y, 0.0).astype(o_ref.dtype)


# ---------------------------------------------------------------------------
# conv2d(stride=1, pad=(K-1)//2, no bias) [+ BN(train) + ReLU]
# ---------------------------------------------------------------------------
def _conv_bn_relu(x_nhwc, w_oihw, gamma, beta, kernel_size, apply_bn_relu,
                  eps=1e-5, tm=256):
    N, H, W, Cin = x_nhwc.shape
    Cout = w_oihw.shape[0]
    K = kernel_size
    p = (K - 1) // 2

    # im2col patch extraction (JAX glue, bf16 to halve DMA bytes).
    # TODO(synk): replace HBM-materialized im2col with in-kernel halo-tile tap
    # accumulation (manual DMA) to cut the K*K activation re-read.
    xp = jnp.pad(x_nhwc, ((0, 0), (p, p), (p, p), (0, 0)))
    cols = [xp[:, dy:dy + H, dx:dx + W, :]
            for dy in range(K) for dx in range(K)]
    patches = jnp.stack(cols, axis=3).reshape(N * H * W, K * K * Cin)
    patches = patches.astype(jnp.bfloat16)

    M = N * H * W
    KC = K * K * Cin

    # MXU / lane friendly padding.
    Cp = _round_up(Cout, 128)
    KCp = _round_up(KC, 128)
    tm = min(tm, _round_up(M, 8))
    Mp = _round_up(M, tm)
    num_tiles = Mp // tm

    patches = jnp.pad(patches, ((0, Mp - M), (0, KCp - KC)))

    # PyTorch weight (Cout, Cin, K, K) -> (K*K*Cin, Cout), zero-padded.
    w2 = jnp.transpose(w_oihw, (2, 3, 1, 0)).reshape(KC, Cout)
    w2 = jnp.pad(w2, ((0, KCp - KC), (0, Cp - Cout))).astype(jnp.bfloat16)

    patch_spec = pl.BlockSpec((tm, KCp), lambda i: (i, 0))
    weight_spec = pl.BlockSpec((KCp, Cp), lambda i: (0, 0))   # VMEM-resident
    ytile_spec = pl.BlockSpec((tm, Cp), lambda i: (i, 0))
    chan_spec = pl.BlockSpec((1, Cp), lambda i: (0, 0))

    if apply_bn_relu:
        y, csum, csq = pl.pallas_call(
            _conv_stats_kernel,
            out_shape=(
                jax.ShapeDtypeStruct((Mp, Cp), jnp.float32),
                jax.ShapeDtypeStruct((1, Cp), jnp.float32),
                jax.ShapeDtypeStruct((1, Cp), jnp.float32),
            ),
            grid=(num_tiles,),
            in_specs=[patch_spec, weight_spec],
            out_specs=(ytile_spec, chan_spec, chan_spec),
            compiler_params=pltpu.CompilerParams(
                dimension_semantics=("arbitrary",),   # stats accumulate over M
                vmem_limit_bytes=_VMEM_LIMIT),
        )(patches, w2)

        # Per-channel BN statistics (zero-padded rows/channels contribute 0).
        mean = csum / float(M)
        var = jnp.maximum(csq / float(M) - mean * mean, 0.0)
        gpad = jnp.pad(gamma.astype(jnp.float32), (0, Cp - Cout)).reshape(1, Cp)
        bpad = jnp.pad(beta.astype(jnp.float32), (0, Cp - Cout)).reshape(1, Cp)
        scale = gpad * jax.lax.rsqrt(var + eps)
        shift = bpad - mean * scale

        out = pl.pallas_call(
            _scale_shift_relu_kernel,
            out_shape=jax.ShapeDtypeStruct((Mp, Cp), jnp.float32),
            grid=(num_tiles,),
            in_specs=[ytile_spec, chan_spec, chan_spec],
            out_specs=ytile_spec,
            compiler_params=pltpu.CompilerParams(
                dimension_semantics=("parallel",),
                vmem_limit_bytes=_VMEM_LIMIT),
        )(y, scale, shift)
    else:
        out = pl.pallas_call(
            _conv_only_kernel,
            out_shape=jax.ShapeDtypeStruct((Mp, Cp), jnp.float32),
            grid=(num_tiles,),
            in_specs=[patch_spec, weight_spec],
            out_specs=ytile_spec,
            compiler_params=pltpu.CompilerParams(
                dimension_semantics=("parallel",),
                vmem_limit_bytes=_VMEM_LIMIT),
        )(patches, w2)

    return out[:M, :Cout].reshape(N, H, W, Cout)


# ---------------------------------------------------------------------------
# Bilinear x2 upsample, align_corners=True (matches the spec's F.interpolate)
# ---------------------------------------------------------------------------
# TODO(synk): gather-based bilinear resize kept in plain JAX; folding the fixed
#             interpolation weights into the up-conv would avoid the 4x HBM
#             round trip but has no clean generic Pallas gather here.
def _upsample2x_bilinear_nhwc(x):
    N, H, W, C = x.shape
    Ho, Wo = 2 * H, 2 * W

    def axis_coords(out_size, in_size):
        if in_size == 1:
            lo = jnp.zeros((out_size,), jnp.int32)
            return lo, lo, jnp.zeros((out_size,), jnp.float32)
        pos = (jnp.arange(out_size, dtype=jnp.float32)
               * (in_size - 1) / (out_size - 1))
        lo = jnp.clip(jnp.floor(pos).astype(jnp.int32), 0, in_size - 2)
        frac = pos - lo.astype(jnp.float32)
        return lo, lo + 1, frac

    h0, h1, fh = axis_coords(Ho, H)
    w0, w1, fw = axis_coords(Wo, W)

    xh = (x[:, h0, :, :] * (1.0 - fh)[None, :, None, None]
          + x[:, h1, :, :] * fh[None, :, None, None])
    out = (xh[:, :, w0, :] * (1.0 - fw)[None, None, :, None]
           + xh[:, :, w1, :] * fw[None, None, :, None])
    return out


# ---------------------------------------------------------------------------
# DecoderBlock
# ---------------------------------------------------------------------------
def init_decoder_block_params(key, input_channels, output_channels,
                              kernel_size, plus_one):
    next_in = input_channels + 1 if plus_one else input_channels
    keys = jax.random.split(key, 9)
    K = kernel_size

    def conv_w(k, cout, cin):
        return 0.1 * jax.random.normal(k, (cout, cin, K, K), jnp.float32)

    return {
        "up_w": conv_w(keys[0], output_channels, input_channels),
        "up_gamma": 1.0 + 0.1 * jax.random.normal(keys[1], (output_channels,)),
        "up_beta": 0.05 * jax.random.normal(keys[2], (output_channels,)),
        "c1_w": conv_w(keys[3], output_channels, next_in),
        "c1_gamma": 1.0 + 0.1 * jax.random.normal(keys[4], (output_channels,)),
        "c1_beta": 0.05 * jax.random.normal(keys[5], (output_channels,)),
        "c2_w": conv_w(keys[6], output_channels, output_channels),
        "c2_gamma": 1.0 + 0.1 * jax.random.normal(keys[7], (output_channels,)),
        "c2_beta": 0.05 * jax.random.normal(keys[8], (output_channels,)),
    }


def decoder_block_forward(params, x_nchw, skip_nchw, depth_nchw,
                          kernel_size, apply_bn_relu):
    """Forward of DecoderBlock. Inputs/outputs are NCHW (PyTorch convention)."""
    x = jnp.transpose(x_nchw, (0, 2, 3, 1))        # -> NHWC
    skip = jnp.transpose(skip_nchw, (0, 2, 3, 1))

    # UpconvolutionLayer: bilinear x2 + conv + BN + ReLU
    xu = _upsample2x_bilinear_nhwc(x)
    xu = _conv_bn_relu(xu, params["up_w"], params["up_gamma"],
                       params["up_beta"], kernel_size, True)

    # concat along channels (last axis in NHWC)
    if depth_nchw is None:
        xc = jnp.concatenate([xu, skip], axis=-1)
    else:
        d = jnp.transpose(depth_nchw, (0, 2, 3, 1))
        d = _upsample2x_bilinear_nhwc(d)
        xc = jnp.concatenate([xu, skip, d], axis=-1)

    x1 = _conv_bn_relu(xc, params["c1_w"], params["c1_gamma"],
                       params["c1_beta"], kernel_size, True)
    x2 = _conv_bn_relu(x1, params["c2_w"], params["c2_gamma"],
                       params["c2_beta"], kernel_size, apply_bn_relu)

    return jnp.transpose(x2, (0, 3, 1, 2))          # -> NCHW


if __name__ == "__main__":
    # Module config (small, consistent with DecoderBlock's channel math):
    #   skip channels = input_channels - output_channels
    input_channels = 8
    output_channels = 4
    kernel_size = 3
    apply_bn_relu = True
    plus_one = True

    N, H, W = 2, 8, 8

    key = jax.random.PRNGKey(0)
    k_par, k_x, k_skip, k_depth = jax.random.split(key, 4)

    params = init_decoder_block_params(k_par, input_channels, output_channels,
                                       kernel_size, plus_one)

    x = jax.random.normal(k_x, (N, input_channels, H, W), jnp.float32)
    skip = jax.random.normal(
        k_skip, (N, input_channels - output_channels, 2 * H, 2 * W),
        jnp.float32)
    depth = jax.random.normal(k_depth, (N, 1, H, W), jnp.float32)

    fwd = jax.jit(functools.partial(decoder_block_forward,
                                    kernel_size=kernel_size,
                                    apply_bn_relu=apply_bn_relu))
    out = fwd(params, x, skip, depth)
    out = jax.block_until_ready(out)

    assert out.shape == (N, output_channels, 2 * H, 2 * W), out.shape
    assert bool(jnp.all(jnp.isfinite(out)))
    print("KERNEL_OK")
</pallas_src>

<mosaic_0001>
module attributes {stable_mosaic.version = 11 : i64} {
  func.func @_conv_stats_kernel(%arg0: i32, %arg1: memref<256x128xbf16, #tpu.memory_space<vmem>>, %arg2: memref<128x128xbf16, #tpu.memory_space<vmem>>, %arg3: memref<256x128xf32, #tpu.memory_space<vmem>>, %arg4: memref<1x128xf32, #tpu.memory_space<vmem>>, %arg5: memref<1x128xf32, #tpu.memory_space<vmem>>) attributes {dimension_semantics = [#tpu.dimension_semantics<arbitrary>], iteration_bounds = array<i64: 2>, scalar_prefetch = 0 : i64, scratch_operands = 0 : i64, tpu.core_type = #tpu.core_type<tc>, window_params = [{transform_indices = @transform_0, window_bounds = array<i64: 256, 128>}, {pipeline_mode = #tpu.pipeline_mode<synchronous>, transform_indices = @transform_1, window_bounds = array<i64: 128, 128>}, {transform_indices = @transform_2, window_bounds = array<i64: 256, 128>}, {pipeline_mode = #tpu.pipeline_mode<synchronous>, transform_indices = @transform_3, window_bounds = array<i64: 1, 128>}, {pipeline_mode = #tpu.pipeline_mode<synchronous>, transform_indices = @transform_4, window_bounds = array<i64: 1, 128>}]} {
    %c0 = arith.constant 0 : index
    %c0_0 = arith.constant 0 : index
    %0 = vector.load %arg1[%c0, %c0_0] : memref<256x128xbf16, #tpu.memory_space<vmem>>, vector<256x128xbf16>
    %c0_1 = arith.constant 0 : index
    %c0_2 = arith.constant 0 : index
    %1 = vector.load %arg2[%c0_1, %c0_2] : memref<128x128xbf16, #tpu.memory_space<vmem>>, vector<128x128xbf16>
    %cst = arith.constant dense<0.000000e+00> : vector<256x128xf32>
    %2 = tpu.matmul %0, %1, %cst {dimension_numbers = #tpu.dot_dimension_numbers<[1], [0], [0], [1], [0, 0, 1, 1], [], []>} : vector<256x128xbf16>, vector<128x128xbf16>, vector<256x128xf32> -> vector<256x128xf32>
    %c0_3 = arith.constant 0 : index
    %c0_4 = arith.constant 0 : index
    %3 = vector.load %arg3[%c0_3, %c0_4] : memref<256x128xf32, #tpu.memory_space<vmem>>, vector<256x128xf32>
    tpu.vector_store %arg3[%c0_3, %c0_4], %2 {strides = array<i32>} : memref<256x128xf32, #tpu.memory_space<vmem>>, vector<256x128xf32>,
    %c0_i32 = arith.constant 0 : i32
    %4 = arith.cmpi eq, %arg0, %c0_i32 : i32
    %5 = arith.extui %4 : i1 to i32
    %c0_i32_5 = arith.constant 0 : i32
    %6 = arith.cmpi ne, %5, %c0_i32_5 : i32
    scf.if %6 {
      %cst_16 = arith.constant 0.000000e+00 : f32
      %18 = vector.broadcast %cst_16 : f32 to vector<1x128xf32>
      %c0_17 = arith.constant 0 : index
      %c0_18 = arith.constant 0 : index
      %19 = vector.load %arg4[%c0_17, %c0_18] : memref<1x128xf32, #tpu.memory_space<vmem>>, vector<1x128xf32>
      tpu.vector_store %arg4[%c0_17, %c0_18], %18 {strides = array<i32>} : memref<1x128xf32, #tpu.memory_space<vmem>>, vector<1x128xf32>,
      %cst_19 = arith.constant 0.000000e+00 : f32
      %20 = vector.broadcast %cst_19 : f32 to vector<1x128xf32>
      %c0_20 = arith.constant 0 : index
      %c0_21 = arith.constant 0 : index
      %21 = vector.load %arg5[%c0_20, %c0_21] : memref<1x128xf32, #tpu.memory_space<vmem>>, vector<1x128xf32>
      tpu.vector_store %arg5[%c0_20, %c0_21], %20 {strides = array<i32>} : memref<1x128xf32, #tpu.memory_space<vmem>>, vector<1x128xf32>,
    } else {
    }
    %c0_6 = arith.constant 0 : index
    %c0_7 = arith.constant 0 : index
    %7 = vector.load %arg4[%c0_6, %c0_7] : memref<1x128xf32, #tpu.memory_space<vmem>>, vector<1x128xf32>
    %cst_8 = arith.constant dense<0.000000e+00> : vector<128xf32>
    %8 = vector.multi_reduction <add>, %2, %cst_8 [0] : vector<256x128xf32> to vector<128xf32>
    %9 = vector.shape_cast %8 : vector<128xf32> to vector<1x128xf32>
    %10 = arith.addf %7, %9 : vector<1x128xf32>
    %c0_9 = arith.constant 0 : index
    %c0_10 = arith.constant 0 : index
    %11 = vector.load %arg4[%c0_9, %c0_10] : memref<1x128xf32, #tpu.memory_space<vmem>>, vector<1x128xf32>
    tpu.vector_store %arg4[%c0_9, %c0_10], %10 {strides = array<i32>} : memref<1x128xf32, #tpu.memory_space<vmem>>, vector<1x128xf32>,
    %c0_11 = arith.constant 0 : index
    %c0_12 = arith.constant 0 : index
    %12 = vector.load %arg5[%c0_11, %c0_12] : memref<1x128xf32, #tpu.memory_space<vmem>>, vector<1x128xf32>
    %13 = arith.mulf %2, %2 : vector<256x128xf32>
    %cst_13 = arith.constant dense<0.000000e+00> : vector<128xf32>
    %14 = vector.multi_reduction <add>, %13, %cst_13 [0] : vector<256x128xf32> to vector<128xf32>
    %15 = vector.shape_cast %14 : vector<128xf32> to vector<1x128xf32>
    %16 = arith.addf %12, %15 : vector<1x128xf32>
    %c0_14 = arith.constant 0 : index
    %c0_15 = arith.constant 0 : index
    %17 = vector.load %arg5[%c0_14, %c0_15] : memref<1x128xf32, #tpu.memory_space<vmem>>, vector<1x128xf32>
    tpu.vector_store %arg5[%c0_14, %c0_15], %16 {strides = array<i32>} : memref<1x128xf32, #tpu.memory_space<vmem>>, vector<1x128xf32>,
    return
  }
  func.func @transform_0(%arg0: i32) -> (i32, i32) {
    %c0_i32 = arith.constant 0 : i32
    %c0_i32_0 = arith.constant 0 : i32
    return %arg0, %c0_i32 : i32, i32
  }
  func.func @transform_1(%arg0: i32) -> (i32, i32) {
    %c0_i32 = arith.constant 0 : i32
    %c0_i32_0 = arith.constant 0 : i32
    %c0_i32_1 = arith.constant 0 : i32
    return %c0_i32, %c0_i32_0 : i32, i32
  }
  func.func @transform_2(%arg0: i32) -> (i32, i32) {
    %c0_i32 = arith.constant 0 : i32
    %c0_i32_0 = arith.constant 0 : i32
    return %arg0, %c0_i32 : i32, i32
  }
  func.func @transform_3(%arg0: i32) -> (i32, i32) {
    %c0_i32 = arith.constant 0 : i32
    %c0_i32_0 = arith.constant 0 : i32
    %c0_i32_1 = arith.constant 0 : i32
    return %c0_i32, %c0_i32_0 : i32, i32
  }
  func.func @transform_4(%arg0: i32) -> (i32, i32) {
    %c0_i32 = arith.constant 0 : i32
    %c0_i32_0 = arith.constant 0 : i32
    %c0_i32_1 = arith.constant 0 : i32
    return %c0_i32, %c0_i32_0 : i32, i32
  }
}

module attributes {stable_mosaic.version = 11 : i64} {
  func.func @_scale_shift_relu_kernel(%arg0: i32, %arg1: memref<256x128xf32, #tpu.memory_space<vmem>>, %arg2: memref<1x128xf32, #tpu.memory_space<vmem>>, %arg3: memref<1x128xf32, #tpu.memory_space<vmem>>, %arg4: memref<256x128xf32, #tpu.memory_space<vmem>>) attributes {dimension_semantics = [#tpu.dimension_semantics<parallel>], iteration_bounds = array<i64: 2>, scalar_prefetch = 0 : i64, scratch_operands = 0 : i64, tpu.core_type = #tpu.core_type<tc>, window_params = [{transform_indices = @transform_0, window_bounds = array<i64: 256, 128>}, {pipeline_mode = #tpu.pipeline_mode<synchronous>, transform_indices = @transform_1, window_bounds = array<i64: 1, 128>}, {pipeline_mode = #tpu.pipeline_mode<synchronous>, transform_indices = @transform_2, window_bounds = array<i64: 1, 128>}, {transform_indices = @transform_3, window_bounds = array<i64: 256, 128>}]} {
    %c0 = arith.constant 0 : index
    %c0_0 = arith.constant 0 : index
    %0 = vector.load %arg1[%c0, %c0_0] : memref<256x128xf32, #tpu.memory_space<vmem>>, vector<256x128xf32>
    %c0_1 = arith.constant 0 : index
    %c0_2 = arith.constant 0 : index
    %1 = vector.load %arg2[%c0_1, %c0_2] : memref<1x128xf32, #tpu.memory_space<vmem>>, vector<1x128xf32>
    %2 = vector.broadcast %1 : vector<1x128xf32> to vector<256x128xf32>
    %3 = arith.mulf %0, %2 : vector<256x128xf32>
    %c0_3 = arith.constant 0 : index
    %c0_4 = arith.constant 0 : index
    %4 = vector.load %arg3[%c0_3, %c0_4] : memref<1x128xf32, #tpu.memory_space<vmem>>, vector<1x128xf32>
    %5 = vector.broadcast %4 : vector<1x128xf32> to vector<256x128xf32>
    %6 = arith.addf %3, %5 : vector<256x128xf32>
    %cst = arith.constant 0.000000e+00 : f32
    %7 = vector.broadcast %cst : f32 to vector<256x128xf32>
    %8 = arith.maximumf %6, %7 : vector<256x128xf32>
    %c0_5 = arith.constant 0 : index
    %c0_6 = arith.constant 0 : index
    %9 = vector.load %arg4[%c0_5, %c0_6] : memref<256x128xf32, #tpu.memory_space<vmem>>, vector<256x128xf32>
    tpu.vector_store %arg4[%c0_5, %c0_6], %8 {strides = array<i32>} : memref<256x128xf32, #tpu.memory_space<vmem>>, vector<256x128xf32>,
    return
  }
  func.func @transform_0(%arg0: i32) -> (i32, i32) {
    %c0_i32 = arith.constant 0 : i32
    %c0_i32_0 = arith.constant 0 : i32
    return %arg0, %c0_i32 : i32, i32
  }
  func.func @transform_1(%arg0: i32) -> (i32, i32) {
    %c0_i32 = arith.constant 0 : i32
    %c0_i32_0 = arith.constant 0 : i32
    %c0_i32_1 = arith.constant 0 : i32
    return %c0_i32, %c0_i32_0 : i32, i32
  }
  func.func @transform_2(%arg0: i32) -> (i32, i32) {
    %c0_i32 = arith.constant 0 : i32
    %c0_i32_0 = arith.constant 0 : i32
    %c0_i32_1 = arith.constant 0 : i32
    return %c0_i32, %c0_i32_0 : i32, i32
  }
  func.func @transform_3(%arg0: i32) -> (i32, i32) {
    %c0_i32 = arith.constant 0 : i32
    %c0_i32_0 = arith.constant 0 : i32
    return %arg0, %c0_i32 : i32, i32
  }
}

</mosaic_0001>

<llo_original>
// kernel: decoder_block_forward.7
$region0: #{decoder_block_forward.7}
  #allocation0 [shape = 'u32[]', space=smem, size = 0x4, offset = 0x4, fixed_abs, tag = 'smem constant byte address 0x4 - core index']
  #allocation1 [shape = 'u32[72,128]{1,0:T(1,128)}', space=vmem, size = 0x9000, scoped, tag = 'internal scratch']
  %s0 = inlined_call_operand.vmem [shape: f32[512,128], index: 0, kind: input, shape index: {}]
  %s1 = inlined_call_operand.vmem [shape: f32[1,128], index: 1, kind: input, shape index: {}]
  %s2 = inlined_call_operand.vmem [shape: f32[1,128], index: 2, kind: input, shape index: {}]
  %s3 = inlined_call_operand.vmem [shape: f32[512,128], index: 3, kind: output, shape index: {}]
  %s4 = sld [smem:[#allocation0]]
  $region45: #{decoder_block_forward.7} parent=0
    _
  %s6 = ssub.s32 1, %s4
  %s7 = scalar_select 0, %s6, %s4
  loop: start=0, step=1, limit=4
  $region2: #{decoder_block_forward.7} parent=0 // loop_pre_header
    _
  $region3: #{decoder_block_forward.7} parent=0 // loop_header
    %s9 = sphi 0, %s13
    %p10 = scmp.ge.s32.totalorder %s9, 4
    %s19 = sphi 0, %s21
    %s22 = sphi 0, %s19
    %s23 = sphi 0, %s22
    %s39 = sphi 0, %s23
    %s43 = sphi 0, %s43
    %s45 = sphi 0, %s43
    %s46 = sphi 0, %s45
    %s60 = sphi 0, %s46
    %s64 = sphi 0, %s64
    %s66 = sphi 0, %s64
    %s67 = sphi 0, %s66
    %s81 = sphi 0, %s67
    %s87 = sphi 0, %s89
    %s90 = sphi 0, %s87
    %s91 = sphi 0, %s90
    %s107 = sphi 0, %s91
  $region4: #{decoder_block_forward.7} parent=0 // loop_header_branch
    %12 = sbr.rel (%p10) target = $region8
  $region5: #{decoder_block_forward.7} parent=0 // loop_body
    %s14 = ssub.s32 %s9, 1
    %s15 = ssub.s32 %s9, 2
    %s16 = sadd.s32 %s9, 1
    %s17 = ssub.s32 %s9, %s16
    %p18 = scmp.eq.s32.totalorder %s17, 0
    %s20 = sadd.s32 %s19, 1
    %s21 = scalar_select %p18, %s19, %s20
    %p24 = pneg %p18
    %p25 = scmp.eq.s32.totalorder %s9, 1
    %p26 = por %p24, %p25
    %p27 = scmp.ne.s32.totalorder %s19, %s22
    %p28 = scmp.eq.s32.totalorder %s9, 0
    %p29 = por %p27, %p28
    %p30 = scmp.ne.s32.totalorder %s19, %s22
    %p31 = scmp.eq.s32.totalorder %s14, 1
    %p32 = por %p30, %p31
    %p33 = scmp.ne.s32.totalorder %s22, %s23
    %p34 = scmp.eq.s32.totalorder %s14, 0
    %p35 = por %p33, %p34
    %p36 = scmp.ne.s32.totalorder %s22, %s23
    %p37 = scmp.eq.s32.totalorder %s15, 1
    %p38 = por %p36, %p37
    %p40 = scmp.ne.s32.totalorder %s23, %s39
    %p41 = scmp.eq.s32.totalorder %s15, 0
    %p42 = por %p40, %p41
    %s44 = sadd.s32 %s43, 1
    %p47 = scmp.eq.s32.totalorder %s9, 1
    %p48 = scmp.ne.s32.totalorder %s43, %s45
    %p49 = scmp.eq.s32.totalorder %s9, 0
    %p50 = por %p48, %p49
    %p51 = scmp.ne.s32.totalorder %s43, %s45
    %p52 = scmp.eq.s32.totalorder %s14, 1
    %p53 = por %p51, %p52
    %p54 = scmp.ne.s32.totalorder %s45, %s46
    %p55 = scmp.eq.s32.totalorder %s14, 0
    %p56 = por %p54, %p55
    %p57 = scmp.ne.s32.totalorder %s45, %s46
    %p58 = scmp.eq.s32.totalorder %s15, 1
    %p59 = por %p57, %p58
    %p61 = scmp.ne.s32.totalorder %s46, %s60
    %p62 = scmp.eq.s32.totalorder %s15, 0
    %p63 = por %p61, %p62
    %s65 = sadd.s32 %s64, 1
    %p68 = scmp.eq.s32.totalorder %s9, 1
    %p69 = scmp.ne.s32.totalorder %s64, %s66
    %p70 = scmp.eq.s32.totalorder %s9, 0
    %p71 = por %p69, %p70
    %p72 = scmp.ne.s32.totalorder %s64, %s66
    %p73 = scmp.eq.s32.totalorder %s14, 1
    %p74 = por %p72, %p73
    %p75 = scmp.ne.s32.totalorder %s66, %s67
    %p76 = scmp.eq.s32.totalorder %s14, 0
    %p77 = por %p75, %p76
    %p78 = scmp.ne.s32.totalorder %s66, %s67
    %p79 = scmp.eq.s32.totalorder %s15, 1
    %p80 = por %p78, %p79
    %p82 = scmp.ne.s32.totalorder %s67, %s81
    %p83 = scmp.eq.s32.totalorder %s15, 0
    %p84 = por %p82, %p83
    %s85 = ssub.s32 %s9, %s16
    %p86 = scmp.eq.s32.totalorder %s85, 0
    %s88 = sadd.s32 %s87, 1
    %s89 = scalar_select %p86, %s87, %s88
    %p92 = pneg %p86
    %p93 = scmp.eq.s32.totalorder %s9, 1
    %p94 = por %p92, %p93
    %p95 = scmp.ne.s32.totalorder %s87, %s90
    %p96 = scmp.eq.s32.totalorder %s9, 0
    %p97 = por %p95, %p96
    %p98 = scmp.ne.s32.totalorder %s87, %s90
    %p99 = scmp.eq.s32.totalorder %s14, 1
    %p100 = por %p98, %p99
    %p101 = scmp.ne.s32.totalorder %s90, %s91
    %p102 = scmp.eq.s32.totalorder %s14, 0
    %p103 = por %p101, %p102
    %p104 = scmp.ne.s32.totalorder %s90, %s91
    %p105 = scmp.eq.s32.totalorder %s15, 1
    %p106 = por %p104, %p105
    %p108 = scmp.ne.s32.totalorder %s91, %s107
    %p109 = scmp.eq.s32.totalorder %s15, 0
    %p110 = por %p108, %p109
    %p111 = scmp.le.s32.totalorder 1, %s9
    %p112 = scmp.lt.s32.totalorder %s9, 3
    %p113 = pnand %p111, %p112
    %p114 = pneg %p113
    // Predicated region
    $region9: #{decoder_block_forward.7} parent=5 // pred_check
      _
    $region10: #{decoder_block_forward.7} parent=5 // pred_check_branch
      %116 = sbr.rel (%p113) target = $region12
    $region11: #{decoder_block_forward.7} parent=5 // pred_region
      %s117 = ssub.s32 %s9, 1
      // Predicated region
      $region13: #{decoder_block_forward.7} parent=11 // pred_check
        %p118 = pneg %p56
      $region14: #{decoder_block_forward.7} parent=11 // pred_check_branch
        %120 = sbr.rel (%p118) target = $region16
      $region15: #{decoder_block_forward.7} parent=11 // pred_region
        _
      $region16: #{decoder_block_forward.7} parent=11 // pred_fallthru
        _
      // Predicated region
      $region17: #{decoder_block_forward.7} parent=11 // pred_check
        %p121 = pneg %p77
      $region18: #{decoder_block_forward.7} parent=11 // pred_check_branch
        %123 = sbr.rel (%p121) target = $region20
      $region19: #{decoder_block_forward.7} parent=11 // pred_region
        _
      $region20: #{decoder_block_forward.7} parent=11 // pred_fallthru
        _
    $region12: #{decoder_block_forward.7} parent=5 // pred_fallthru
      _
    %p124 = scmp.lt.s32.totalorder %s9, 2
    // Predicated region
    $region21: #{decoder_block_forward.7} parent=5 // pred_check
      %p125 = pneg %p124
    $region22: #{decoder_block_forward.7} parent=5 // pred_check_branch
      %127 = sbr.rel (%p125) target = $region24
    $region23: #{decoder_block_forward.7} parent=5 // pred_region
      // Predicated region
      $region25: #{decoder_block_forward.7} parent=23 // pred_check
        %p128 = pneg %p29
      $region26: #{decoder_block_forward.7} parent=23 // pred_check_branch
        %130 = sbr.rel (%p128) target = $region28
      $region27: #{decoder_block_forward.7} parent=23 // pred_region
        %s131 = smul.u32 32, %s9
        %p132 = scmp.lt.s32.totalorder %s131, 63
        %s133 = scalar_select %p132, %s131, 63
        %s134 = smul.addr %s133, 8
        %s135 = scalar_lea.vmem %s0, %s134
        %s136 = smul.u32 32, %s9
      $region28: #{decoder_block_forward.7} parent=23 // pred_fallthru
        _
    $region24: #{decoder_block_forward.7} parent=5 // pred_fallthru
      _
    %p137 = scmp.le.s32.totalorder 1, %s9
    %p138 = scmp.lt.s32.totalorder %s9, 3
    %p139 = pnand %p137, %p138
    %p140 = pneg %p139
    // Predicated region
    $region29: #{decoder_block_forward.7} parent=5 // pred_check
      _
    $region30: #{decoder_block_forward.7} parent=5 // pred_check_branch
      %142 = sbr.rel (%p139) target = $region32
    $region31: #{decoder_block_forward.7} parent=5 // pred_region
      %s143 = ssub.s32 %s9, 1
      %s144 = smul.u32 32, %s14
      %p145 = scmp.lt.s32.totalorder %s144, 63
      %s146 = scalar_select %p145, %s144, 63
      %s147 = smul.addr %s146, 8
      %s148 = scalar_lea.vmem %s0, %s147
      %p149 = pneg %p35
      %p150 = pneg %p32
      %p151 = pneg %p56
      %p152 = pneg %p53
      %p153 = pneg %p77
      %p154 = pneg %p74
      %p155 = pneg %p103
      %p156 = pneg %p100
      %s157 = smul.u32 32, %s14
      %p158 = scmp.lt.s32.totalorder %s157, 63
      %s159 = scalar_select %p158, %s157, 63
      %s160 = smul.addr %s159, 8
      %s161 = scalar_lea.vmem %s3, %s160
      %s162 = smul.u32 32, %s14
      %p163 = scmp.lt.s32.totalorder %s162, 63
      %s164 = scalar_select %p163, %s162, 63
      %s165 = smul.addr %s164, 8
      %s166 = scalar_lea.vmem %s0, %s165
      %s167 = smul.u32 32, %s14
      %s168 = smul.u32 32, %s14
      %p169 = scmp.lt.s32.totalorder %s168, 63
      %s170 = scalar_select %p169, %s168, 63
      %s171 = smul.addr %s170, 8
      %s172 = scalar_lea.vmem %s3, %s171
      %s173 = smul.u32 32, %s14
      %v174 = vld [vmem:[%s166] sm:$0xff]
      %v175 = vld [vmem:[%s166 + $0x8] sm:$0xff]
      %v176 = vld [vmem:[%s166 + $0x10] sm:$0xff]
      %v177 = vld [vmem:[%s166 + $0x18] sm:$0xff]
      %v178 = vld [vmem:[%s166 + $0x20] sm:$0xff]
      %v179 = vld [vmem:[%s166 + $0x28] sm:$0xff]
      %v180 = vld [vmem:[%s166 + $0x30] sm:$0xff]
      %v181 = vld [vmem:[%s166 + $0x38] sm:$0xff]
      %v182 = vld [vmem:[%s166 + $0x40] sm:$0xff]
      %v183 = vld [vmem:[%s166 + $0x48] sm:$0xff]
      %v184 = vld [vmem:[%s166 + $0x50] sm:$0xff]
      %v185 = vld [vmem:[%s166 + $0x58] sm:$0xff]
      %v186 = vld [vmem:[%s166 + $0x60] sm:$0xff]
      %v187 = vld [vmem:[%s166 + $0x68] sm:$0xff]
      %v188 = vld [vmem:[%s166 + $0x70] sm:$0xff]
      %v189 = vld [vmem:[%s166 + $0x78] sm:$0xff]
      %v190 = vld [vmem:[%s166 + $0x80] sm:$0xff]
      %v191 = vld [vmem:[%s166 + $0x88] sm:$0xff]
      %v192 = vld [vmem:[%s166 + $0x90] sm:$0xff]
      %v193 = vld [vmem:[%s166 + $0x98] sm:$0xff]
      %v194 = vld [vmem:[%s166 + $0xa0] sm:$0xff]
      %v195 = vld [vmem:[%s166 + $0xa8] sm:$0xff]
      %v196 = vld [vmem:[%s166 + $0xb0] sm:$0xff]
      %v197 = vld [vmem:[%s166 + $0xb8] sm:$0xff]
      %v198 = vld [vmem:[%s166 + $0xc0] sm:$0xff]
      %v199 = vld [vmem:[%s166 + $0xc8] sm:$0xff]
      %v200 = vld [vmem:[%s166 + $0xd0] sm:$0xff]
      %v201 = vld [vmem:[%s166 + $0xd8] sm:$0xff]
      %v202 = vld [vmem:[%s166 + $0xe0] sm:$0xff]
      %v203 = vld [vmem:[%s166 + $0xe8] sm:$0xff]
      %v204 = vld [vmem:[%s166 + $0xf0] sm:$0xff]
      %v205 = vld [vmem:[%s166 + $0xf8] sm:$0xff]
      %v206 = vld [vmem:[%s1] sm:$0x1]
      %v208 = vperm.slane %v206, 0
      %v210 = vmul.f32 %v174, %v208
      %v211 = vmul.f32 %v175, %v208
      %v212 = vmul.f32 %v176, %v208
      %v213 = vmul.f32 %v177, %v208
      %v214 = vmul.f32 %v178, %v208
      %v215 = vmul.f32 %v179, %v208
      %v216 = vmul.f32 %v180, %v208
      %v217 = vmul.f32 %v181, %v208
      %v218 = vmul.f32 %v182, %v208
      %v219 = vmul.f32 %v183, %v208
      %v220 = vmul.f32 %v184, %v208
      %v221 = vmul.f32 %v185, %v208
      %v222 = vmul.f32 %v186, %v208
      %v223 = vmul.f32 %v187, %v208
      %v224 = vmul.f32 %v188, %v208
      %v225 = vmul.f32 %v189, %v208
      %v226 = vmul.f32 %v190, %v208
      %v227 = vmul.f32 %v191, %v208
      %v228 = vmul.f32 %v192, %v208
      %v229 = vmul.f32 %v193, %v208
      %v230 = vmul.f32 %v194, %v208
      %v231 = vmul.f32 %v195, %v208
      %v232 = vmul.f32 %v196, %v208
      %v233 = vmul.f32 %v197, %v208
      %v234 = vmul.f32 %v198, %v208
      %v235 = vmul.f32 %v199, %v208
      %v236 = vmul.f32 %v200, %v208
      %v237 = vmul.f32 %v201, %v208
      %v238 = vmul.f32 %v202, %v208
      %v239 = vmul.f32 %v203, %v208
      %v240 = vmul.f32 %v204, %v208
      %v241 = vmul.f32 %v205, %v208
      %v242 = vld [vmem:[%s2] sm:$0x1]
      %v244 = vperm.slane %v242, 0
      %v246 = vadd.f32 %v210, %v244
      %v247 = vadd.f32 %v211, %v244
      %v248 = vadd.f32 %v212, %v244
      %v249 = vadd.f32 %v213, %v244
      %v250 = vadd.f32 %v214, %v244
      %v251 = vadd.f32 %v215, %v244
      %v252 = vadd.f32 %v216, %v244
      %v253 = vadd.f32 %v217, %v244
      %v254 = vadd.f32 %v218, %v244
      %v255 = vadd.f32 %v219, %v244
      %v256 = vadd.f32 %v220, %v244
      %v257 = vadd.f32 %v221, %v244
      %v258 = vadd.f32 %v222, %v244
      %v259 = vadd.f32 %v223, %v244
      %v260 = vadd.f32 %v224, %v244
      %v261 = vadd.f32 %v225, %v244
      %v262 = vadd.f32 %v226, %v244
      %v263 = vadd.f32 %v227, %v244
      %v264 = vadd.f32 %v228, %v244
      %v265 = vadd.f32 %v229, %v244
      %v266 = vadd.f32 %v230, %v244
      %v267 = vadd.f32 %v231, %v244
      %v268 = vadd.f32 %v232, %v244
      %v269 = vadd.f32 %v233, %v244
      %v270 = vadd.f32 %v234, %v244
      %v271 = vadd.f32 %v235, %v244
      %v272 = vadd.f32 %v236, %v244
      %v273 = vadd.f32 %v237, %v244
      %v274 = vadd.f32 %v238, %v244
      %v275 = vadd.f32 %v239, %v244
      %v276 = vadd.f32 %v240, %v244
      %v277 = vadd.f32 %v241, %v244
      %v278 = vmax.f32 %v246, 0.0
      %v279 = vmax.f32 %v247, 0.0
      %v280 = vmax.f32 %v248, 0.0
      %v281 = vmax.f32 %v249, 0.0
      %v282 = vmax.f32 %v250, 0.0
      %v283 = vmax.f32 %v251, 0.0
      %v284 = vmax.f32 %v252, 0.0
      %v285 = vmax.f32 %v253, 0.0
      %v286 = vmax.f32 %v254, 0.0
      %v287 = vmax.f32 %v255, 0.0
      %v288 = vmax.f32 %v256, 0.0
      %v289 = vmax.f32 %v257, 0.0
      %v290 = vmax.f32 %v258, 0.0
      %v291 = vmax.f32 %v259, 0.0
      %v292 = vmax.f32 %v260, 0.0
      %v293 = vmax.f32 %v261, 0.0
      %v294 = vmax.f32 %v262, 0.0
      %v295 = vmax.f32 %v263, 0.0
      %v296 = vmax.f32 %v264, 0.0
      %v297 = vmax.f32 %v265, 0.0
      %v298 = vmax.f32 %v266, 0.0
      %v299 = vmax.f32 %v267, 0.0
      %v300 = vmax.f32 %v268, 0.0
      %v301 = vmax.f32 %v269, 0.0
      %v302 = vmax.f32 %v270, 0.0
      %v303 = vmax.f32 %v271, 0.0
      %v304 = vmax.f32 %v272, 0.0
      %v305 = vmax.f32 %v273, 0.0
      %v306 = vmax.f32 %v274, 0.0
      %v307 = vmax.f32 %v275, 0.0
      %v308 = vmax.f32 %v276, 0.0
      %v309 = vmax.f32 %v277, 0.0
      %310 = vst [vmem:[%s172] sm:$0xff] %v278
      %311 = vst [vmem:[%s172 + $0x8] sm:$0xff] %v279
      %312 = vst [vmem:[%s172 + $0x10] sm:$0xff] %v280
      %313 = vst [vmem:[%s172 + $0x18] sm:$0xff] %v281
      %314 = vst [vmem:[%s172 + $0x20] sm:$0xff] %v282
      %315 = vst [vmem:[%s172 + $0x28] sm:$0xff] %v283
      %316 = vst [vmem:[%s172 + $0x30] sm:$0xff] %v284
      %317 = vst [vmem:[%s172 + $0x38] sm:$0xff] %v285
      %318 = vst [vmem:[%s172 + $0x40] sm:$0xff] %v286
      %319 = vst [vmem:[%s172 + $0x48] sm:$0xff] %v287
      %320 = vst [vmem:[%s172 + $0x50] sm:$0xff] %v288
      %321 = vst [vmem:[%s172 + $0x58] sm:$0xff] %v289
      %322 = vst [vmem:[%s172 + $0x60] sm:$0xff] %v290
      %323 = vst [vmem:[%s172 + $0x68] sm:$0xff] %v291
      %324 = vst [vmem:[%s172 + $0x70] sm:$0xff] %v292
      %325 = vst [vmem:[%s172 + $0x78] sm:$0xff] %v293
      %326 = vst [vmem:[%s172 + $0x80] sm:$0xff] %v294
      %327 = vst [vmem:[%s172 + $0x88] sm:$0xff] %v295
      %328 = vst [vmem:[%s172 + $0x90] sm:$0xff] %v296
      %329 = vst [vmem:[%s172 + $0x98] sm:$0xff] %v297
      %330 = vst [vmem:[%s172 + $0xa0] sm:$0xff] %v298
      %331 = vst [vmem:[%s172 + $0xa8] sm:$0xff] %v299
      %332 = vst [vmem:[%s172 + $0xb0] sm:$0xff] %v300
      %333 = vst [vmem:[%s172 + $0xb8] sm:$0xff] %v301
      %334 = vst [vmem:[%s172 + $0xc0] sm:$0xff] %v302
      %335 = vst [vmem:[%s172 + $0xc8] sm:$0xff] %v303
      %336 = vst [vmem:[%s172 + $0xd0] sm:$0xff] %v304
      %337 = vst [vmem:[%s172 + $0xd8] sm:$0xff] %v305
      %338 = vst [vmem:[%s172 + $0xe0] sm:$0xff] %v306
      %339 = vst [vmem:[%s172 + $0xe8] sm:$0xff] %v307
      %340 = vst [vmem:[%s172 + $0xf0] sm:$0xff] %v308
      %341 = vst [vmem:[%s172 + $0xf8] sm:$0xff] %v309
      %s342 = smul.u32 32, %s14
      %p343 = scmp.lt.s32.totalorder %s342, 63
      %s344 = scalar_select %p343, %s342, 63
      %s345 = smul.addr %s344, 8
      %s346 = scalar_lea.vmem %s3, %s345
      // Predicated region
      $region33: #{decoder_block_forward.7} parent=31 // pred_check
        %p347 = pneg %p100
      $region34: #{decoder_block_forward.7} parent=31 // pred_check_branch
        %349 = sbr.rel (%p347) target = $region36
      $region35: #{decoder_block_forward.7} parent=31 // pred_region
        %s350 = smul.u32 32, %s14
      $region36: #{decoder_block_forward.7} parent=31 // pred_fallthru
        _
    $region32: #{decoder_block_forward.7} parent=5 // pred_fallthru
      _
    %p351 = scmp.le.s32.totalorder 2, %s9
    // Predicated region
    $region37: #{decoder_block_forward.7} parent=5 // pred_check
      %p352 = pneg %p351
    $region38: #{decoder_block_forward.7} parent=5 // pred_check_branch
      %354 = sbr.rel (%p352) target = $region40
    $region39: #{decoder_block_forward.7} parent=5 // pred_region
      %s355 = ssub.s32 %s9, 2
      // Predicated region
      $region41: #{decoder_block_forward.7} parent=39 // pred_check
        %p356 = pneg %p106
      $region42: #{decoder_block_forward.7} parent=39 // pred_check_branch
        %358 = sbr.rel (%p356) target = $region44
      $region43: #{decoder_block_forward.7} parent=39 // pred_region
        %s359 = smul.u32 32, %s15
        %p360 = scmp.lt.s32.totalorder %s359, 63
        %s361 = scalar_select %p360, %s359, 63
        %s362 = smul.addr %s361, 8
        %s363 = scalar_lea.vmem %s3, %s362
      $region44: #{decoder_block_forward.7} parent=39 // pred_fallthru
        _
    $region40: #{decoder_block_forward.7} parent=5 // pred_fallthru
      _
  $region6: #{decoder_block_forward.7} parent=0 // loop_footer
    %s13 = sadd.s32 1, %s9
  $region7: #{decoder_block_forward.7} parent=0 // loop_footer_branch
    %8 = sbr.rel target = $region3
  $region8: #{decoder_block_forward.7} parent=0 // loop_exit
    _

// kernel: decoder_block_forward.6
$region0: #{decoder_block_forward.6}
  #allocation0 [shape = 'u32[]', space=smem, size = 0x4, offset = 0x4, fixed_abs, tag = 'smem constant byte address 0x4 - core index']
  #allocation1 [shape = 'u32[72,128]{1,0:T(1,128)}', space=vmem, size = 0x9000, scoped, tag = 'internal scratch']
  %s0 = inlined_call_operand.vmem [shape: bf16[512,128], index: 0, kind: input, shape index: {}]
  %s1 = inlined_call_operand.vmem [shape: bf16[128,128], index: 1, kind: input, shape index: {}]
  %s2 = inlined_call_operand.vmem [shape: f32[512,128], index: 2, kind: output, shape index: {0}]
  %s3 = inlined_call_operand.vmem [shape: f32[1,128], index: 3, kind: output, shape index: {1}]
  %s4 = inlined_call_operand.vmem [shape: f32[1,128], index: 4, kind: output, shape index: {2}]
  %5 = xla_tuple %s2, %s3, %s4
  %s6 = sld [smem:[#allocation0]]
  $region61: #{decoder_block_forward.6} parent=0
    _
  %s8 = ssub.s32 1, %s6
  %s9 = scalar_select 0, %s8, %s6
  loop: start=0, step=1, limit=4
  $region2: #{decoder_block_forward.6} parent=0 // loop_pre_header
    _
  $region3: #{decoder_block_forward.6} parent=0 // loop_header
    %s11 = sphi 0, %s15
    %p12 = scmp.ge.s32.totalorder %s11, 4
    %s21 = sphi 0, %s23
    %s24 = sphi 0, %s21
    %s25 = sphi 0, %s24
    %s41 = sphi 0, %s25
    %s45 = sphi 0, %s45
    %s47 = sphi 0, %s45
    %s48 = sphi 0, %s47
    %s62 = sphi 0, %s48
    %s68 = sphi 0, %s70
    %s71 = sphi 0, %s68
    %s72 = sphi 0, %s71
    %s88 = sphi 0, %s72
    %s92 = sphi 0, %s92
    %s94 = sphi 0, %s92
    %s95 = sphi 0, %s94
    %s109 = sphi 0, %s95
    %s113 = sphi 0, %s113
    %s115 = sphi 0, %s113
    %s116 = sphi 0, %s115
    %s130 = sphi 0, %s116
  $region4: #{decoder_block_forward.6} parent=0 // loop_header_branch
    %14 = sbr.rel (%p12) target = $region8
  $region5: #{decoder_block_forward.6} parent=0 // loop_body
    %s16 = ssub.s32 %s11, 1
    %s17 = ssub.s32 %s11, 2
    %s18 = sadd.s32 %s11, 1
    %s19 = ssub.s32 %s11, %s18
    %p20 = scmp.eq.s32.totalorder %s19, 0
    %s22 = sadd.s32 %s21, 1
    %s23 = scalar_select %p20, %s21, %s22
    %p26 = pneg %p20
    %p27 = scmp.eq.s32.totalorder %s11, 1
    %p28 = por %p26, %p27
    %p29 = scmp.ne.s32.totalorder %s21, %s24
    %p30 = scmp.eq.s32.totalorder %s11, 0
    %p31 = por %p29, %p30
    %p32 = scmp.ne.s32.totalorder %s21, %s24
    %p33 = scmp.eq.s32.totalorder %s16, 1
    %p34 = por %p32, %p33
    %p35 = scmp.ne.s32.totalorder %s24, %s25
    %p36 = scmp.eq.s32.totalorder %s16, 0
    %p37 = por %p35, %p36
    %p38 = scmp.ne.s32.totalorder %s24, %s25
    %p39 = scmp.eq.s32.totalorder %s17, 1
    %p40 = por %p38, %p39
    %p42 = scmp.ne.s32.totalorder %s25, %s41
    %p43 = scmp.eq.s32.totalorder %s17, 0
    %p44 = por %p42, %p43
    %s46 = sadd.s32 %s45, 1
    %p49 = scmp.eq.s32.totalorder %s11, 1
    %p50 = scmp.ne.s32.totalorder %s45, %s47
    %p51 = scmp.eq.s32.totalorder %s11, 0
    %p52 = por %p50, %p51
    %p53 = scmp.ne.s32.totalorder %s45, %s47
    %p54 = scmp.eq.s32.totalorder %s16, 1
    %p55 = por %p53, %p54
    %p56 = scmp.ne.s32.totalorder %s47, %s48
    %p57 = scmp.eq.s32.totalorder %s16, 0
    %p58 = por %p56, %p57
    %p59 = scmp.ne.s32.totalorder %s47, %s48
    %p60 = scmp.eq.s32.totalorder %s17, 1
    %p61 = por %p59, %p60
    %p63 = scmp.ne.s32.totalorder %s48, %s62
    %p64 = scmp.eq.s32.totalorder %s17, 0
    %p65 = por %p63, %p64
    %s66 = ssub.s32 %s11, %s18
    %p67 = scmp.eq.s32.totalorder %s66, 0
    %s69 = sadd.s32 %s68, 1
    %s70 = scalar_select %p67, %s68, %s69
    %p73 = pneg %p67
    %p74 = scmp.eq.s32.totalorder %s11, 1
    %p75 = por %p73, %p74
    %p76 = scmp.ne.s32.totalorder %s68, %s71
    %p77 = scmp.eq.s32.totalorder %s11, 0
    %p78 = por %p76, %p77
    %p79 = scmp.ne.s32.totalorder %s68, %s71
    %p80 = scmp.eq.s32.totalorder %s16, 1
    %p81 = por %p79, %p80
    %p82 = scmp.ne.s32.totalorder %s71, %s72
    %p83 = scmp.eq.s32.totalorder %s16, 0
    %p84 = por %p82, %p83
    %p85 = scmp.ne.s32.totalorder %s71, %s72
    %p86 = scmp.eq.s32.totalorder %s17, 1
    %p87 = por %p85, %p86
    %p89 = scmp.ne.s32.totalorder %s72, %s88
    %p90 = scmp.eq.s32.totalorder %s17, 0
    %p91 = por %p89, %p90
    %s93 = sadd.s32 %s92, 1
    %p96 = scmp.eq.s32.totalorder %s11, 1
    %p97 = scmp.ne.s32.totalorder %s92, %s94
    %p98 = scmp.eq.s32.totalorder %s11, 0
    %p99 = por %p97, %p98
    %p100 = scmp.ne.s32.totalorder %s92, %s94
    %p101 = scmp.eq.s32.totalorder %s16, 1
    %p102 = por %p100, %p101
    %p103 = scmp.ne.s32.totalorder %s94, %s95
    %p104 = scmp.eq.s32.totalorder %s16, 0
    %p105 = por %p103, %p104
    %p106 = scmp.ne.s32.totalorder %s94, %s95
    %p107 = scmp.eq.s32.totalorder %s17, 1
    %p108 = por %p106, %p107
    %p110 = scmp.ne.s32.totalorder %s95, %s109
    %p111 = scmp.eq.s32.totalorder %s17, 0
    %p112 = por %p110, %p111
    %s114 = sadd.s32 %s113, 1
    %p117 = scmp.eq.s32.totalorder %s11, 1
    %p118 = scmp.ne.s32.totalorder %s113, %s115
    %p119 = scmp.eq.s32.totalorder %s11, 0
    %p120 = por %p118, %p119
    %p121 = scmp.ne.s32.totalorder %s113, %s115
    %p122 = scmp.eq.s32.totalorder %s16, 1
    %p123 = por %p121, %p122
    %p124 = scmp.ne.s32.totalorder %s115, %s116
    %p125 = scmp.eq.s32.totalorder %s16, 0
    %p126 = por %p124, %p125
    %p127 = scmp.ne.s32.totalorder %s115, %s116
    %p128 = scmp.eq.s32.totalorder %s17, 1
    %p129 = por %p127, %p128
    %p131 = scmp.ne.s32.totalorder %s116, %s130
    %p132 = scmp.eq.s32.totalorder %s17, 0
    %p133 = por %p131, %p132
    %p134 = scmp.le.s32.totalorder 1, %s11
    %p135 = scmp.lt.s32.totalorder %s11, 3
    %p136 = pnand %p134, %p135
    %p137 = pneg %p136
    // Predicated region
    $region9: #{decoder_block_forward.6} parent=5 // pred_check
      _
    $region10: #{decoder_block_forward.6} parent=5 // pred_check_branch
      %139 = sbr.rel (%p136) target = $region12
    $region11: #{decoder_block_forward.6} parent=5 // pred_region
      %s140 = ssub.s32 %s11, 1
      // Predicated region
      $region13: #{decoder_block_forward.6} parent=11 // pred_check
        %p141 = pneg %p58
      $region14: #{decoder_block_forward.6} parent=11 // pred_check_branch
        %143 = sbr.rel (%p141) target = $region16
      $region15: #{decoder_block_forward.6} parent=11 // pred_region
        _
      $region16: #{decoder_block_forward.6} parent=11 // pred_fallthru
        _
    $region12: #{decoder_block_forward.6} parent=5 // pred_fallthru
      _
    %p144 = scmp.lt.s32.totalorder %s11, 2
    // Predicated region
    $region17: #{decoder_block_forward.6} parent=5 // pred_check
      %p145 = pneg %p144
    $region18: #{decoder_block_forward.6} parent=5 // pred_check_branch
      %147 = sbr.rel (%p145) target = $region20
    $region19: #{decoder_block_forward.6} parent=5 // pred_region
      // Predicated region
      $region21: #{decoder_block_forward.6} parent=19 // pred_check
        %p148 = pneg %p31
      $region22: #{decoder_block_forward.6} parent=19 // pred_check_branch
        %150 = sbr.rel (%p148) target = $region24
      $region23: #{decoder_block_forward.6} parent=19 // pred_region
        %s151 = smul.u32 32, %s11
        %p152 = scmp.lt.s32.totalorder %s151, 63
        %s153 = scalar_select %p152, %s151, 63
        %s154 = smul.addr %s153, 4
        %s155 = scalar_lea.vmem %s0, %s154
        %s156 = smul.u32 32, %s11
      $region24: #{decoder_block_forward.6} parent=19 // pred_fallthru
        _
    $region20: #{decoder_block_forward.6} parent=5 // pred_fallthru
      _
    %p157 = scmp.le.s32.totalorder 1, %s11
    %p158 = scmp.lt.s32.totalorder %s11, 3
    %p159 = pnand %p157, %p158
    %p160 = pneg %p159
    // Predicated region
    $region25: #{decoder_block_forward.6} parent=5 // pred_check
      _
    $region26: #{decoder_block_forward.6} parent=5 // pred_check_branch
      %162 = sbr.rel (%p159) target = $region28
    $region27: #{decoder_block_forward.6} parent=5 // pred_region
      %s163 = ssub.s32 %s11, 1
      %s164 = smul.u32 32, %s16
      %p165 = scmp.lt.s32.totalorder %s164, 63
      %s166 = scalar_select %p165, %s164, 63
      %s167 = smul.addr %s166, 4
      %s168 = scalar_lea.vmem %s0, %s167
      %p169 = pneg %p37
      %p170 = pneg %p34
      %p171 = pneg %p58
      %p172 = pneg %p55
      %p173 = pneg %p84
      %p174 = pneg %p81
      %s175 = smul.u32 32, %s16
      %p176 = scmp.lt.s32.totalorder %s175, 63
      %s177 = scalar_select %p176, %s175, 63
      %s178 = smul.addr %s177, 8
      %s179 = scalar_lea.vmem %s2, %s178
      %p180 = pneg %p105
      %p181 = pneg %p102
      %p182 = pneg %p126
      %p183 = pneg %p123
      %s184 = smul.u32 32, %s16
      %p185 = scmp.lt.s32.totalorder %s184, 63
      %s186 = scalar_select %p185, %s184, 63
      %s187 = smul.addr %s186, 4
      %s188 = scalar_lea.vmem %s0, %s187
      %s189 = smul.u32 32, %s16
      %s190 = smul.u32 32, %s16
      %p191 = scmp.lt.s32.totalorder %s190, 63
      %s192 = scalar_select %p191, %s190, 63
      %s193 = smul.addr %s192, 8
      %s194 = scalar_lea.vmem %s2, %s193
      %s195 = smul.u32 32, %s16
      %v196 = vld [vmem:[%s188] sm:$0xf]
      %v197 = vld [vmem:[%s188 + $0x4] sm:$0xf]
      %v198 = vld [vmem:[%s188 + $0x8] sm:$0xf]
      %v199 = vld [vmem:[%s188 + $0xc] sm:$0xf]
      %v200 = vld [vmem:[%s188 + $0x10] sm:$0xf]
      %v201 = vld [vmem:[%s188 + $0x14] sm:$0xf]
      %v202 = vld [vmem:[%s188 + $0x18] sm:$0xf]
      %v203 = vld [vmem:[%s188 + $0x1c] sm:$0xf]
      %v204 = vld [vmem:[%s188 + $0x20] sm:$0xf]
      %v205 = vld [vmem:[%s188 + $0x24] sm:$0xf]
      %v206 = vld [vmem:[%s188 + $0x28] sm:$0xf]
      %v207 = vld [vmem:[%s188 + $0x2c] sm:$0xf]
      %v208 = vld [vmem:[%s188 + $0x30] sm:$0xf]
      %v209 = vld [vmem:[%s188 + $0x34] sm:$0xf]
      %v210 = vld [vmem:[%s188 + $0x38] sm:$0xf]
      %v211 = vld [vmem:[%s188 + $0x3c] sm:$0xf]
      %v212 = vld [vmem:[%s188 + $0x40] sm:$0xf]
      %v213 = vld [vmem:[%s188 + $0x44] sm:$0xf]
      %v214 = vld [vmem:[%s188 + $0x48] sm:$0xf]
      %v215 = vld [vmem:[%s188 + $0x4c] sm:$0xf]
      %v216 = vld [vmem:[%s188 + $0x50] sm:$0xf]
      %v217 = vld [vmem:[%s188 + $0x54] sm:$0xf]
      %v218 = vld [vmem:[%s188 + $0x58] sm:$0xf]
      %v219 = vld [vmem:[%s188 + $0x5c] sm:$0xf]
      %v220 = vld [vmem:[%s188 + $0x60] sm:$0xf]
      %v221 = vld [vmem:[%s188 + $0x64] sm:$0xf]
      %v222 = vld [vmem:[%s188 + $0x68] sm:$0xf]
      %v223 = vld [vmem:[%s188 + $0x6c] sm:$0xf]
      %v224 = vld [vmem:[%s188 + $0x70] sm:$0xf]
      %v225 = vld [vmem:[%s188 + $0x74] sm:$0xf]
      %v226 = vld [vmem:[%s188 + $0x78] sm:$0xf]
      %v227 = vld [vmem:[%s188 + $0x7c] sm:$0xf]
      %v228 = vld [vmem:[%s1] sm:$0xf]
      %v229 = vld [vmem:[%s1 + $0x4] sm:$0xf]
      %v230 = vld [vmem:[%s1 + $0x8] sm:$0xf]
      %v231 = vld [vmem:[%s1 + $0xc] sm:$0xf]
      %v232 = vld [vmem:[%s1 + $0x10] sm:$0xf]
      %v233 = vld [vmem:[%s1 + $0x14] sm:$0xf]
      %v234 = vld [vmem:[%s1 + $0x18] sm:$0xf]
      %v235 = vld [vmem:[%s1 + $0x1c] sm:$0xf]
      %v236 = vld [vmem:[%s1 + $0x20] sm:$0xf]
      %v237 = vld [vmem:[%s1 + $0x24] sm:$0xf]
      %v238 = vld [vmem:[%s1 + $0x28] sm:$0xf]
      %v239 = vld [vmem:[%s1 + $0x2c] sm:$0xf]
      %v240 = vld [vmem:[%s1 + $0x30] sm:$0xf]
      %v241 = vld [vmem:[%s1 + $0x34] sm:$0xf]
      %v242 = vld [vmem:[%s1 + $0x38] sm:$0xf]
      %v243 = vld [vmem:[%s1 + $0x3c] sm:$0xf]
      %v276 = vunpack.c.l.b16 %v196
      %v277 = vunpack.c.l.b16 %v197
      %v278 = vunpack.c.l.b16 %v198
      %v279 = vunpack.c.l.b16 %v199
      %v280 = vunpack.c.l.b16 %v200
      %v281 = vunpack.c.l.b16 %v201
      %v282 = vunpack.c.l.b16 %v202
      %v283 = vunpack.c.l.b16 %v203
      %v284 = vunpack.c.l.b16 %v204
      %v285 = vunpack.c.l.b16 %v205
      %v286 = vunpack.c.l.b16 %v206
      %v287 = vunpack.c.l.b16 %v207
      %v288 = vunpack.c.l.b16 %v208
      %v289 = vunpack.c.l.b16 %v209
      %v290 = vunpack.c.l.b16 %v210
      %v291 = vunpack.c.l.b16 %v211
      %v292 = vunpack.c.l.b16 %v212
      %v293 = vunpack.c.l.b16 %v213
      %v294 = vunpack.c.l.b16 %v214
      %v295 = vunpack.c.l.b16 %v215
      %v296 = vunpack.c.l.b16 %v216
      %v297 = vunpack.c.l.b16 %v217
      %v298 = vunpack.c.l.b16 %v218
      %v299 = vunpack.c.l.b16 %v219
      %v300 = vunpack.c.l.b16 %v220
      %v301 = vunpack.c.l.b16 %v221
      %v302 = vunpack.c.l.b16 %v222
      %v303 = vunpack.c.l.b16 %v223
      %v304 = vunpack.c.l.b16 %v224
      %v305 = vunpack.c.l.b16 %v225
      %v306 = vunpack.c.l.b16 %v226
      %v307 = vunpack.c.l.b16 %v227
      %v308 = vpack.c.b16 %v277, %v276
      %v309 = vpack.c.b16 %v279, %v278
      %v310 = vpack.c.b16 %v281, %v280
      %v311 = vpack.c.b16 %v283, %v282
      %v312 = vpack.c.b16 %v285, %v284
      %v313 = vpack.c.b16 %v287, %v286
      %v314 = vpack.c.b16 %v289, %v288
      %v315 = vpack.c.b16 %v291, %v290
      %v316 = vpack.c.b16 %v293, %v292
      %v317 = vpack.c.b16 %v295, %v294
      %v318 = vpack.c.b16 %v297, %v296
      %v319 = vpack.c.b16 %v299, %v298
      %v320 = vpack.c.b16 %v301, %v300
      %v321 = vpack.c.b16 %v303, %v302
      %v322 = vpack.c.b16 %v305, %v304
      %v323 = vpack.c.b16 %v307, %v306
      %v356 = vunpack.c.l.b16 %v228
      %v357 = vunpack.c.l.b16 %v229
      %v358 = vunpack.c.l.b16 %v230
      %v359 = vunpack.c.l.b16 %v231
      %v360 = vunpack.c.l.b16 %v232
      %v361 = vunpack.c.l.b16 %v233
      %v362 = vunpack.c.l.b16 %v234
      %v363 = vunpack.c.l.b16 %v235
      %v364 = vunpack.c.l.b16 %v236
      %v365 = vunpack.c.l.b16 %v237
      %v366 = vunpack.c.l.b16 %v238
      %v367 = vunpack.c.l.b16 %v239
      %v368 = vunpack.c.l.b16 %v240
      %v369 = vunpack.c.l.b16 %v241
      %v370 = vunpack.c.l.b16 %v242
      %v371 = vunpack.c.l.b16 %v243
      %v372 = vpack.c.b16 %v357, %v356
      %v373 = vpack.c.b16 %v359, %v358
      %v374 = vpack.c.b16 %v361, %v360
      %v375 = vpack.c.b16 %v363, %v362
      %v376 = vpack.c.b16 %v365, %v364
      %v377 = vpack.c.b16 %v367, %v366
      %v378 = vpack.c.b16 %v369, %v368
      %v379 = vpack.c.b16 %v371, %v370
      %388 = vmatpush.bf16.msra.mxu0 %v379
      %389 = vmatpush.bf16.msra.mxu0 %v378
      %390 = vmatpush.bf16.msra.mxu0 %v377
      %391 = vmatpush.bf16.msra.mxu0 %v376
      %392 = vmatpush.bf16.msra.mxu0 %v375
      %393 = vmatpush.bf16.msra.mxu0 %v374
      %394 = vmatpush.bf16.msra.mxu0 %v373
      %395 = vmatpush.bf16.msra.mxu0 %v372
      %396 = vmatmul.bf16.gmra.mxu0 %v308
      %v397 = vpop.f32.mrf.mxu0
      %v398 = vadd.f32 0.0, %v397
      %v399 = vpop.f32.mrf.mxu0
      %v400 = vadd.f32 0.0, %v399
      %401 = vmatmul.bf16.gmra.mxu0 %v309
      %v402 = vpop.f32.mrf.mxu0
      %v403 = vadd.f32 0.0, %v402
      %v404 = vpop.f32.mrf.mxu0
      %v405 = vadd.f32 0.0, %v404
      %406 = vmatmul.bf16.gmra.mxu0 %v310
      %v407 = vpop.f32.mrf.mxu0
      %v408 = vadd.f32 0.0, %v407
      %v409 = vpop.f32.mrf.mxu0
      %v410 = vadd.f32 0.0, %v409
      %411 = vmatmul.bf16.gmra.mxu0 %v311
      %v412 = vpop.f32.mrf.mxu0
      %v413 = vadd.f32 0.0, %v412
      %v414 = vpop.f32.mrf.mxu0
      %v415 = vadd.f32 0.0, %v414
      %416 = vmatmul.bf16.gmra.mxu0 %v312
      %v417 = vpop.f32.mrf.mxu0
      %v418 = vadd.f32 0.0, %v417
      %v419 = vpop.f32.mrf.mxu0
      %v420 = vadd.f32 0.0, %v419
      %421 = vmatmul.bf16.gmra.mxu0 %v313
      %v422 = vpop.f32.mrf.mxu0
      %v423 = vadd.f32 0.0, %v422
      %v424 = vpop.f32.mrf.mxu0
      %v425 = vadd.f32 0.0, %v424
      %426 = vmatmul.bf16.gmra.mxu0 %v314
      %v427 = vpop.f32.mrf.mxu0
      %v428 = vadd.f32 0.0, %v427
      %v429 = vpop.f32.mrf.mxu0
      %v430 = vadd.f32 0.0, %v429
      %431 = vmatmul.bf16.gmra.mxu0 %v315
      %v432 = vpop.f32.mrf.mxu0
      %v433 = vadd.f32 0.0, %v432
      %v434 = vpop.f32.mrf.mxu0
      %v435 = vadd.f32 0.0, %v434
      %436 = vmatmul.bf16.gmra.mxu0 %v316
      %v437 = vpop.f32.mrf.mxu0
      %v438 = vadd.f32 0.0, %v437
      %v439 = vpop.f32.mrf.mxu0
      %v440 = vadd.f32 0.0, %v439
      %441 = vmatmul.bf16.gmra.mxu0 %v317
      %v442 = vpop.f32.mrf.mxu0
      %v443 = vadd.f32 0.0, %v442
      %v444 = vpop.f32.mrf.mxu0
      %v445 = vadd.f32 0.0, %v444
      %446 = vmatmul.bf16.gmra.mxu0 %v318
      %v447 = vpop.f32.mrf.mxu0
      %v448 = vadd.f32 0.0, %v447
      %v449 = vpop.f32.mrf.mxu0
      %v450 = vadd.f32 0.0, %v449
      %451 = vmatmul.bf16.gmra.mxu0 %v319
      %v452 = vpop.f32.mrf.mxu0
      %v453 = vadd.f32 0.0, %v452
      %v454 = vpop.f32.mrf.mxu0
      %v455 = vadd.f32 0.0, %v454
      %456 = vmatmul.bf16.gmra.mxu0 %v320
      %v457 = vpop.f32.mrf.mxu0
      %v458 = vadd.f32 0.0, %v457
      %v459 = vpop.f32.mrf.mxu0
      %v460 = vadd.f32 0.0, %v459
      %461 = vmatmul.bf16.gmra.mxu0 %v321
      %v462 = vpop.f32.mrf.mxu0
      %v463 = vadd.f32 0.0, %v462
      %v464 = vpop.f32.mrf.mxu0
      %v465 = vadd.f32 0.0, %v464
      %466 = vmatmul.bf16.gmra.mxu0 %v322
      %v467 = vpop.f32.mrf.mxu0
      %v468 = vadd.f32 0.0, %v467
      %v469 = vpop.f32.mrf.mxu0
      %v470 = vadd.f32 0.0, %v469
      %471 = vmatmul.bf16.gmra.mxu0 %v323
      %v472 = vpop.f32.mrf.mxu0
      %v473 = vadd.f32 0.0, %v472
      %v474 = vpop.f32.mrf.mxu0
      %v475 = vadd.f32 0.0, %v474
      %476 = vdwg.mxu0
      %477 = vst [vmem:[%s194] sm:$0xff] %v398
      %478 = vst [vmem:[%s194 + $0x8] sm:$0xff] %v400
      %479 = vst [vmem:[%s194 + $0x10] sm:$0xff] %v403
      %480 = vst [vmem:[%s194 + $0x18] sm:$0xff] %v405
      %481 = vst [vmem:[%s194 + $0x20] sm:$0xff] %v408
      %482 = vst [vmem:[%s194 + $0x28] sm:$0xff] %v410
      %483 = vst [vmem:[%s194 + $0x30] sm:$0xff] %v413
      %484 = vst [vmem:[%s194 + $0x38] sm:$0xff] %v415
      %485 = vst [vmem:[%s194 + $0x40] sm:$0xff] %v418
      %486 = vst [vmem:[%s194 + $0x48] sm:$0xff] %v420
      %487 = vst [vmem:[%s194 + $0x50] sm:$0xff] %v423
      %488 = vst [vmem:[%s194 + $0x58] sm:$0xff] %v425
      %489 = vst [vmem:[%s194 + $0x60] sm:$0xff] %v428
      %490 = vst [vmem:[%s194 + $0x68] sm:$0xff] %v430
      %491 = vst [vmem:[%s194 + $0x70] sm:$0xff] %v433
      %492 = vst [vmem:[%s194 + $0x78] sm:$0xff] %v435
      %493 = vst [vmem:[%s194 + $0x80] sm:$0xff] %v438
      %494 = vst [vmem:[%s194 + $0x88] sm:$0xff] %v440
      %495 = vst [vmem:[%s194 + $0x90] sm:$0xff] %v443
      %496 = vst [vmem:[%s194 + $0x98] sm:$0xff] %v445
      %497 = vst [vmem:[%s194 + $0xa0] sm:$0xff] %v448
      %498 = vst [vmem:[%s194 + $0xa8] sm:$0xff] %v450
      %499 = vst [vmem:[%s194 + $0xb0] sm:$0xff] %v453
      %500 = vst [vmem:[%s194 + $0xb8] sm:$0xff] %v455
      %501 = vst [vmem:[%s194 + $0xc0] sm:$0xff] %v458
      %502 = vst [vmem:[%s194 + $0xc8] sm:$0xff] %v460
      %503 = vst [vmem:[%s194 + $0xd0] sm:$0xff] %v463
      %504 = vst [vmem:[%s194 + $0xd8] sm:$0xff] %v465
      %505 = vst [vmem:[%s194 + $0xe0] sm:$0xff] %v468
      %506 = vst [vmem:[%s194 + $0xe8] sm:$0xff] %v470
      %507 = vst [vmem:[%s194 + $0xf0] sm:$0xff] %v473
      %508 = vst [vmem:[%s194 + $0xf8] sm:$0xff] %v475
      %p509 = scmp.eq.s32.totalorder %s16, 0
      // Predicated region
      $region29: #{decoder_block_forward.6} parent=27 // pred_check
        %p510 = pneg %p509
      $region30: #{decoder_block_forward.6} parent=27 // pred_check_branch
        %512 = sbr.rel (%p510) target = $region32
      $region31: #{decoder_block_forward.6} parent=27 // pred_region
        %513 = vst [vmem:[%s3] sm:$0x1] 0.0
        %514 = vst [vmem:[%s4] sm:$0x1] 0.0
      $region32: #{decoder_block_forward.6} parent=27 // pred_fallthru
        _
      %v515 = vld [vmem:[%s3] sm:$0x1]
      %v516 = vadd.f32 %v398, %v400
      %v517 = vadd.f32 %v516, %v403
      %v518 = vadd.f32 %v517, %v405
      %v519 = vadd.f32 %v518, %v408
      %v520 = vadd.f32 %v519, %v410
      %v521 = vadd.f32 %v520, %v413
      %v522 = vadd.f32 %v521, %v415
      %v523 = vadd.f32 %v522, %v418
      %v524 = vadd.f32 %v523, %v420
      %v525 = vadd.f32 %v524, %v423
      %v526 = vadd.f32 %v525, %v425
      %v527 = vadd.f32 %v526, %v428
      %v528 = vadd.f32 %v527, %v430
      %v529 = vadd.f32 %v528, %v433
      %v530 = vadd.f32 %v529, %v435
      %v531 = vadd.f32 %v530, %v438
      %v532 = vadd.f32 %v531, %v440
      %v533 = vadd.f32 %v532, %v443
      %v534 = vadd.f32 %v533, %v445
      %v535 = vadd.f32 %v534, %v448
      %v536 = vadd.f32 %v535, %v450
      %v537 = vadd.f32 %v536, %v453
      %v538 = vadd.f32 %v537, %v455
      %v539 = vadd.f32 %v538, %v458
      %v540 = vadd.f32 %v539, %v460
      %v541 = vadd.f32 %v540, %v463
      %v542 = vadd.f32 %v541, %v465
      %v543 = vadd.f32 %v542, %v468
      %v544 = vadd.f32 %v543, %v470
      %v545 = vadd.f32 %v544, %v473
      %v546 = vadd.f32 %v545, %v475
      %v547 = vrot.slane %v546, 4
      %v548 = vadd.f32 %v546, %v547
      %v549 = vrot.slane %v548, 2
      %v550 = vadd.f32 %v548, %v549
      %v551 = vrot.slane %v550, 1
      %v552 = vadd.f32 %v550, %v551
      %v553 = vadd.f32 %v515, %v552
      %554 = vst [vmem:[%s3] sm:$0x1] %v553
      %v555 = vld [vmem:[%s4] sm:$0x1]
      %v556 = vmul.f32 %v398, %v398
      %v557 = vmul.f32 %v400, %v400
      %v558 = vmul.f32 %v403, %v403
      %v559 = vmul.f32 %v405, %v405
      %v560 = vmul.f32 %v408, %v408
      %v561 = vmul.f32 %v410, %v410
      %v562 = vmul.f32 %v413, %v413
      %v563 = vmul.f32 %v415, %v415
      %v564 = vmul.f32 %v418, %v418
      %v565 = vmul.f32 %v420, %v420
      %v566 = vmul.f32 %v423, %v423
      %v567 = vmul.f32 %v425, %v425
      %v568 = vmul.f32 %v428, %v428
      %v569 = vmul.f32 %v430, %v430
      %v570 = vmul.f32 %v433, %v433
      %v571 = vmul.f32 %v435, %v435
      %v572 = vmul.f32 %v438, %v438
      %v573 = vmul.f32 %v440, %v440
      %v574 = vmul.f32 %v443, %v443
      %v575 = vmul.f32 %v445, %v445
      %v576 = vmul.f32 %v448, %v448
      %v577 = vmul.f32 %v450, %v450
      %v578 = vmul.f32 %v453, %v453
      %v579 = vmul.f32 %v455, %v455
      %v580 = vmul.f32 %v458, %v458
      %v581 = vmul.f32 %v460, %v460
      %v582 = vmul.f32 %v463, %v463
      %v583 = vmul.f32 %v465, %v465
      %v584 = vmul.f32 %v468, %v468
      %v585 = vmul.f32 %v470, %v470
      %v586 = vmul.f32 %v473, %v473
      %v587 = vmul.f32 %v475, %v475
      %v588 = vadd.f32 %v556, %v557
      %v589 = vadd.f32 %v588, %v558
      %v590 = vadd.f32 %v589, %v559
      %v591 = vadd.f32 %v590, %v560
      %v592 = vadd.f32 %v591, %v561
      %v593 = vadd.f32 %v592, %v562
      %v594 = vadd.f32 %v593, %v563
      %v595 = vadd.f32 %v594, %v564
      %v596 = vadd.f32 %v595, %v565
      %v597 = vadd.f32 %v596, %v566
      %v598 = vadd.f32 %v597, %v567
      %v599 = vadd.f32 %v598, %v568
      %v600 = vadd.f32 %v599, %v569
      %v601 = vadd.f32 %v600, %v570
      %v602 = vadd.f32 %v601, %v571
      %v603 = vadd.f32 %v602, %v572
      %v604 = vadd.f32 %v603, %v573
      %v605 = vadd.f32 %v604, %v574
      %v606 = vadd.f32 %v605, %v575
      %v607 = vadd.f32 %v606, %v576
      %v608 = vadd.f32 %v607, %v577
      %v609 = vadd.f32 %v608, %v578
      %v610 = vadd.f32 %v609, %v579
      %v611 = vadd.f32 %v610, %v580
      %v612 = vadd.f32 %v611, %v581
      %v613 = vadd.f32 %v612, %v582
      %v614 = vadd.f32 %v613, %v583
      %v615 = vadd.f32 %v614, %v584
      %v616 = vadd.f32 %v615, %v585
      %v617 = vadd.f32 %v616, %v586
      %v618 = vadd.f32 %v617, %v587
      %v619 = vrot.slane %v618, 4
      %v620 = vadd.f32 %v618, %v619
      %v621 = vrot.slane %v620, 2
      %v622 = vadd.f32 %v620, %v621
      %v623 = vrot.slane %v622, 1
      %v624 = vadd.f32 %v622, %v623
      %v625 = vadd.f32 %v555, %v624
      %626 = vst [vmem:[%s4] sm:$0x1] %v625
      %s627 = smul.u32 32, %s16
      %p628 = scmp.lt.s32.totalorder %s627, 63
      %s629 = scalar_select %p628, %s627, 63
      %s630 = smul.addr %s629, 8
      %s631 = scalar_lea.vmem %s2, %s630
      // Predicated region
      $region33: #{decoder_block_forward.6} parent=27 // pred_check
        %p632 = pneg %p81
      $region34: #{decoder_block_forward.6} parent=27 // pred_check_branch
        %634 = sbr.rel (%p632) target = $region36
      $region35: #{decoder_block_forward.6} parent=27 // pred_region
        %s635 = smul.u32 32, %s16
      $region36: #{decoder_block_forward.6} parent=27 // pred_fallthru
        _
      // Predicated region
      $region37: #{decoder_block_forward.6} parent=27 // pred_check
        %p636 = pneg %p102
      $region38: #{decoder_block_forward.6} parent=27 // pred_check_branch
        %638 = sbr.rel (%p636) target = $region40
      $region39: #{decoder_block_forward.6} parent=27 // pred_region
        _
      $region40: #{decoder_block_forward.6} parent=27 // pred_fallthru
        _
      // Predicated region
      $region41: #{decoder_block_forward.6} parent=27 // pred_check
        %p639 = pneg %p123
      $region42: #{decoder_block_forward.6} parent=27 // pred_check_branch
        %641 = sbr.rel (%p639) target = $region44
      $region43: #{decoder_block_forward.6} parent=27 // pred_region
        _
      $region44: #{decoder_block_forward.6} parent=27 // pred_fallthru
        _
      // Predicated region
      $region45: #{decoder_block_forward.6} parent=27 // pred_check
        %p642 = pneg %p102
      $region46: #{decoder_block_forward.6} parent=27 // pred_check_branch
        %644 = sbr.rel (%p642) target = $region48
      $region47: #{decoder_block_forward.6} parent=27 // pred_region
        _
      $region48: #{decoder_block_forward.6} parent=27 // pred_fallthru
        _
      // Predicated region
      $region49: #{decoder_block_forward.6} parent=27 // pred_check
        %p645 = pneg %p123
      $region50: #{decoder_block_forward.6} parent=27 // pred_check_branch
        %647 = sbr.rel (%p645) target = $region52
      $region51: #{decoder_block_forward.6} parent=27 // pred_region
        _
      $region52: #{decoder_block_forward.6} parent=27 // pred_fallthru
        _
    $region28: #{decoder_block_forward.6} parent=5 // pred_fallthru
      _
    %p648 = scmp.le.s32.totalorder 2, %s11
    // Predicated region
    $region53: #{decoder_block_forward.6} parent=5 // pred_check
      %p649 = pneg %p648
    $region54: #{decoder_block_forward.6} parent=5 // pred_check_branch
      %651 = sbr.rel (%p649) target = $region56
    $region55: #{decoder_block_forward.6} parent=5 // pred_region
      %s652 = ssub.s32 %s11, 2
      // Predicated region
      $region57: #{decoder_block_forward.6} parent=55 // pred_check
        %p653 = pneg %p87
      $region58: #{decoder_block_forward.6} parent=55 // pred_check_branch
        %655 = sbr.rel (%p653) target = $region60
      $region59: #{decoder_block_forward.6} parent=55 // pred_region
        %s656 = smul.u32 32, %s17
        %p657 = scmp.lt.s32.totalorder %s656, 63
        %s658 = scalar_select %p657, %s656, 63
        %s659 = smul.addr %s658, 8
        %s660 = scalar_lea.vmem %s2, %s659
      $region60: #{decoder_block_forward.6} parent=55 // pred_fallthru
        _
    $region56: #{decoder_block_forward.6} parent=5 // pred_fallthru
      _
  $region6: #{decoder_block_forward.6} parent=0 // loop_footer
    %s15 = sadd.s32 1, %s11
  $region7: #{decoder_block_forward.6} parent=0 // loop_footer_branch
    %10 = sbr.rel target = $region3
  $region8: #{decoder_block_forward.6} parent=0 // loop_exit
    _

</llo_original>
